<compile_context>
chip_gen: v6e
topology: v6e:2x2x1
jax: 0.10.0
libtpu: 0.0.40
codegen_flags: <defaults>
</compile_context>

<pallas_src>
import jax
import jax.numpy as jnp
from jax import lax
from jax.experimental import pallas as pl
from jax.experimental.pallas import tpu as pltpu


def _sigmoid(x):
    # One EUP op (tanh) instead of exp + reciprocal; numerically identical.
    return 0.5 * jnp.tanh(0.5 * x) + 0.5


def _make_kernel(num_layers: int):
    L = num_layers

    def kernel(*refs):
        # refs = [xp, w_hh0_T, (w_cat_l, bias_l) for l in 1..L-1, out]
        xp_ref = refs[0]            # (T, B, 4H): x @ W_ih0^T + b0, time-major
        whh0_ref = refs[1]          # (H, 4H)
        out_ref = refs[-1]          # (T, B, H): last-layer h for every step
        layer_refs = refs[2:-1]

        T, B, H4 = xp_ref.shape
        H = H4 // 4

        # Hoist weight loads and bias broadcasts out of the recurrent loop.
        whh0 = whh0_ref[...]
        wcats = [layer_refs[2 * i][...] for i in range(L - 1)]
        biases = [jnp.broadcast_to(layer_refs[2 * i + 1][...], (B, H4))
                  for i in range(L - 1)]

        def cell(gates, c):
            i_g = _sigmoid(gates[:, 0 * H:1 * H])
            f_g = _sigmoid(gates[:, 1 * H:2 * H])
            g_g = jnp.tanh(gates[:, 2 * H:3 * H])
            o_g = _sigmoid(gates[:, 3 * H:4 * H])
            c_new = f_g * c + i_g * g_g
            h_new = o_g * jnp.tanh(c_new)
            return h_new, c_new

        def body(t, carry):
            hs, cs = carry
            hs, cs = list(hs), list(cs)
            # Layer 0: input projection precomputed; only the recurrent dot.
            gates = xp_ref[t] + jnp.dot(hs[0], whh0,
                                        preferred_element_type=jnp.float32)
            hs[0], cs[0] = cell(gates, cs[0])
            inp = hs[0]
            for l in range(1, L):                       # static unroll over layers
                xh = jnp.concatenate([inp, hs[l]], axis=-1)       # (B, 2H)
                gates = jnp.dot(xh, wcats[l - 1],
                                preferred_element_type=jnp.float32)
                gates = gates + biases[l - 1]
                hs[l], cs[l] = cell(gates, cs[l])
                inp = hs[l]
            out_ref[t] = inp
            return tuple(hs), tuple(cs)

        zeros = tuple(jnp.zeros((B, H), jnp.float32) for _ in range(L))
        lax.fori_loop(0, T, body, (zeros, zeros))

    return kernel


def pack_params(params):
    """Repack PyTorch-layout params into the kernel-friendly layout."""
    w_ih_t, w_hh_t, biases, wo_t, bo = params
    L = len(w_ih_t)
    w_ih0_t = w_ih_t[0]                                   # (I, 4H)
    bias0 = biases[0]                                     # (1, 4H)
    w_hh0_t = w_hh_t[0]                                   # (H, 4H)
    w_cat = tuple(jnp.concatenate([w_ih_t[l], w_hh_t[l]], axis=0)
                  for l in range(1, L))                   # (2H, 4H) each
    b_rest = tuple(biases[l] for l in range(1, L))        # (1, 4H) each
    return (w_ih0_t, bias0, w_hh0_t, w_cat, b_rest, wo_t, bo)


def one_hot_lstm_forward(x, packed):
    """x: [B, T, input_size] (batch_first, same as the PyTorch module)."""
    w_ih0_t, bias0, w_hh0_t, w_cat, b_rest, wo_t, bo = packed
    L = 1 + len(w_cat)
    B, T, _ = x.shape
    H = w_hh0_t.shape[0]

    xf = x.astype(jnp.float32)
    # Hoisted layer-0 input projection over ALL timesteps, bias folded in.
    # The einsum yields the time-major layout directly (transpose fused).
    xp = jnp.einsum('bti,ig->tbg', xf, w_ih0_t,
                    preferred_element_type=jnp.float32) + bias0    # (T, B, 4H)

    layer_args = []
    for wc, bb in zip(w_cat, b_rest):
        layer_args += [wc, bb]

    vmem = pl.BlockSpec(memory_space=pltpu.MemorySpace.VMEM)
    h_all = pl.pallas_call(
        _make_kernel(L),
        out_shape=jax.ShapeDtypeStruct((T, B, H), jnp.float32),
        in_specs=[vmem] * (2 + len(layer_args)),
        out_specs=vmem,
    )(xp, w_hh0_t, *layer_args)

    # Hoisted Linear head: one lane-dense batched matmul; the time-major ->
    # batch-first transpose is fused into the contraction.
    y = jnp.einsum('tbh,ho->bto', h_all, wo_t,
                   preferred_element_type=jnp.float32) + bo        # (B, T, O)
    return y.astype(x.dtype)


def init_params(key, input_size, hidden, layers, output_size):
    """Deterministic PyTorch-style init: U(-1/sqrt(H), 1/sqrt(H))."""
    k = 1.0 / jnp.sqrt(jnp.float32(hidden))
    keys = jax.random.split(key, 4 * layers + 2)
    w_ih_t, w_hh_t, biases = [], [], []
    for l in range(layers):
        in_dim = input_size if l == 0 else hidden
        w_ih = jax.random.uniform(keys[4 * l + 0], (4 * hidden, in_dim),
                                  jnp.float32, -k, k)
        w_hh = jax.random.uniform(keys[4 * l + 1], (4 * hidden, hidden),
                                  jnp.float32, -k, k)
        b_ih = jax.random.uniform(keys[4 * l + 2], (4 * hidden,),
                                  jnp.float32, -k, k)
        b_hh = jax.random.uniform(keys[4 * l + 3], (4 * hidden,),
                                  jnp.float32, -k, k)
        w_ih_t.append(w_ih.T)                                  # [in_dim, 4H]
        w_hh_t.append(w_hh.T)                                  # [H, 4H]
        biases.append((b_ih + b_hh).reshape(1, 4 * hidden))    # [1, 4H]
    ko = 1.0 / jnp.sqrt(jnp.float32(hidden))
    wo = jax.random.uniform(keys[-2], (output_size, hidden), jnp.float32, -ko, ko)
    bo = jax.random.uniform(keys[-1], (output_size,), jnp.float32, -ko, ko)
    return (tuple(w_ih_t), tuple(w_hh_t), tuple(biases),
            wo.T, bo.reshape(1, output_size))


def reference_forward(x, params):
    """Pure-JAX reference replicating torch.nn.LSTM(batch_first) + Linear."""
    w_ih_t, w_hh_t, biases, wo_t, bo = params
    L = len(w_ih_t)
    B, T, _ = x.shape
    H = w_hh_t[0].shape[0]
    h = [jnp.zeros((B, H), jnp.float32) for _ in range(L)]
    c = [jnp.zeros((B, H), jnp.float32) for _ in range(L)]
    outs = []
    for t in range(T):
        inp = x[:, t, :].astype(jnp.float32)
        for l in range(L):
            gates = inp @ w_ih_t[l] + h[l] @ w_hh_t[l] + biases[l]
            i_g = jax.nn.sigmoid(gates[:, 0 * H:1 * H])
            f_g = jax.nn.sigmoid(gates[:, 1 * H:2 * H])
            g_g = jnp.tanh(gates[:, 2 * H:3 * H])
            o_g = jax.nn.sigmoid(gates[:, 3 * H:4 * H])
            c[l] = f_g * c[l] + i_g * g_g
            h[l] = o_g * jnp.tanh(c[l])
            inp = h[l]
        outs.append(inp @ wo_t + bo)
    yp = jnp.stack(outs, axis=1)                               # [B, T, O]
    return yp.astype(x.dtype)


if __name__ == "__main__":
    # Small shapes consistent with the [batch, sequence, input] contract.
    B, T = 2, 8
    INPUT, HIDDEN, LAYERS, OUTPUT = 14, 32, 2, 6

    key = jax.random.PRNGKey(0)
    k_x, k_p = jax.random.split(key)
    x = jax.random.normal(k_x, (B, T, INPUT), jnp.float32)
    params = init_params(k_p, INPUT, HIDDEN, LAYERS, OUTPUT)
    packed = pack_params(params)

    fwd = jax.jit(one_hot_lstm_forward)
    y = fwd(x, packed)
    jax.block_until_ready(y)

    y_ref = reference_forward(x, params)
    assert y.shape == (B, T, OUTPUT)
    assert jnp.allclose(y, y_ref, atol=1e-4, rtol=1e-4), "mismatch vs reference"

    print("KERNEL_OK")
</pallas_src>

<mosaic_0001>
module attributes {stable_mosaic.version = 11 : i64} {
  func.func @kernel(%arg0: memref<8x2x128xf32, #tpu.memory_space<vmem>>, %arg1: memref<32x128xf32, #tpu.memory_space<vmem>>, %arg2: memref<64x128xf32, #tpu.memory_space<vmem>>, %arg3: memref<1x128xf32, #tpu.memory_space<vmem>>, %arg4: memref<8x2x32xf32, #tpu.memory_space<vmem>>) attributes {dimension_semantics = [], scalar_prefetch = 0 : i64, scratch_operands = 0 : i64, tpu.core_type = #tpu.core_type<tc>} {
    %c0 = arith.constant 0 : index
    %c0_0 = arith.constant 0 : index
    %0 = vector.load %arg1[%c0, %c0_0] : memref<32x128xf32, #tpu.memory_space<vmem>>, vector<32x128xf32>
    %c0_1 = arith.constant 0 : index
    %c0_2 = arith.constant 0 : index
    %1 = vector.load %arg2[%c0_1, %c0_2] : memref<64x128xf32, #tpu.memory_space<vmem>>, vector<64x128xf32>
    %c0_3 = arith.constant 0 : index
    %c0_4 = arith.constant 0 : index
    %2 = vector.load %arg3[%c0_3, %c0_4] : memref<1x128xf32, #tpu.memory_space<vmem>>, vector<1x128xf32>
    %3 = vector.shape_cast %2 : vector<1x128xf32> to vector<1x128xf32>
    %4 = vector.broadcast %3 : vector<1x128xf32> to vector<2x128xf32>
    %cst = arith.constant 0.000000e+00 : f32
    %5 = vector.broadcast %cst : f32 to vector<2x32xf32>
    %cst_5 = arith.constant 0.000000e+00 : f32
    %6 = vector.broadcast %cst_5 : f32 to vector<2x32xf32>
    %c0_i32 = arith.constant 0 : i32
    %c8_i32 = arith.constant 8 : i32
    %7 = arith.addi %c0_i32, %c8_i32 : i32
    %c1_i32 = arith.constant 1 : i32
    %8:4 = scf.for %arg5 = %c0_i32 to %7 step %c1_i32 iter_args(%arg6 = %5, %arg7 = %6, %arg8 = %5, %arg9 = %6) -> (vector<2x32xf32>, vector<2x32xf32>, vector<2x32xf32>, vector<2x32xf32>)  : i32 {
      %9 = arith.index_cast %arg5 : i32 to index
      %c0_7 = arith.constant 0 : index
      %c0_8 = arith.constant 0 : index
      %10 = vector.load %arg0[%9, %c0_7, %c0_8] : memref<8x2x128xf32, #tpu.memory_space<vmem>>, vector<1x2x128xf32>
      %11 = vector.shape_cast %10 : vector<1x2x128xf32> to vector<2x128xf32>
      %cst_9 = arith.constant dense<0.000000e+00> : vector<2x128xf32>
      %12 = tpu.matmul %arg6, %0, %cst_9 {dimension_numbers = #tpu.dot_dimension_numbers<[1], [0], [0], [1], [0, 0, 1, 1], [], []>} : vector<2x32xf32>, vector<32x128xf32>, vector<2x128xf32> -> vector<2x128xf32>
      %13 = arith.addf %11, %12 : vector<2x128xf32>
      %14 = vector.extract_strided_slice %13 {offsets = [0, 0], sizes = [2, 32], strides = [1, 1]} : vector<2x128xf32> to vector<2x32xf32>
      %cst_10 = arith.constant 5.000000e-01 : f32
      %15 = vector.broadcast %cst_10 : f32 to vector<2x32xf32>
      %16 = arith.mulf %15, %14 : vector<2x32xf32>
      %17 = math.tanh %16 : vector<2x32xf32>
      %cst_11 = arith.constant 5.000000e-01 : f32
      %18 = vector.broadcast %cst_11 : f32 to vector<2x32xf32>
      %19 = arith.mulf %18, %17 : vector<2x32xf32>
      %cst_12 = arith.constant 5.000000e-01 : f32
      %20 = vector.broadcast %cst_12 : f32 to vector<2x32xf32>
      %21 = arith.addf %19, %20 : vector<2x32xf32>
      %22 = vector.extract_strided_slice %13 {offsets = [0, 32], sizes = [2, 32], strides = [1, 1]} : vector<2x128xf32> to vector<2x32xf32>
      %cst_13 = arith.constant 5.000000e-01 : f32
      %23 = vector.broadcast %cst_13 : f32 to vector<2x32xf32>
      %24 = arith.mulf %23, %22 : vector<2x32xf32>
      %25 = math.tanh %24 : vector<2x32xf32>
      %cst_14 = arith.constant 5.000000e-01 : f32
      %26 = vector.broadcast %cst_14 : f32 to vector<2x32xf32>
      %27 = arith.mulf %26, %25 : vector<2x32xf32>
      %cst_15 = arith.constant 5.000000e-01 : f32
      %28 = vector.broadcast %cst_15 : f32 to vector<2x32xf32>
      %29 = arith.addf %27, %28 : vector<2x32xf32>
      %30 = vector.extract_strided_slice %13 {offsets = [0, 64], sizes = [2, 32], strides = [1, 1]} : vector<2x128xf32> to vector<2x32xf32>
      %31 = math.tanh %30 : vector<2x32xf32>
      %32 = vector.extract_strided_slice %13 {offsets = [0, 96], sizes = [2, 32], strides = [1, 1]} : vector<2x128xf32> to vector<2x32xf32>
      %cst_16 = arith.constant 5.000000e-01 : f32
      %33 = vector.broadcast %cst_16 : f32 to vector<2x32xf32>
      %34 = arith.mulf %33, %32 : vector<2x32xf32>
      %35 = math.tanh %34 : vector<2x32xf32>
      %cst_17 = arith.constant 5.000000e-01 : f32
      %36 = vector.broadcast %cst_17 : f32 to vector<2x32xf32>
      %37 = arith.mulf %36, %35 : vector<2x32xf32>
      %cst_18 = arith.constant 5.000000e-01 : f32
      %38 = vector.broadcast %cst_18 : f32 to vector<2x32xf32>
      %39 = arith.addf %37, %38 : vector<2x32xf32>
      %40 = arith.mulf %29, %arg8 : vector<2x32xf32>
      %41 = arith.mulf %21, %31 : vector<2x32xf32>
      %42 = arith.addf %40, %41 : vector<2x32xf32>
      %43 = math.tanh %42 : vector<2x32xf32>
      %44 = arith.mulf %39, %43 : vector<2x32xf32>
      %45 = tpu.concatenate %44, %arg7 in 1 : vector<2x32xf32>, vector<2x32xf32> -> vector<2x64xf32>
      %cst_19 = arith.constant dense<0.000000e+00> : vector<2x128xf32>
      %46 = tpu.matmul %45, %1, %cst_19 {dimension_numbers = #tpu.dot_dimension_numbers<[1], [0], [0], [1], [0, 0, 1, 1], [], []>} : vector<2x64xf32>, vector<64x128xf32>, vector<2x128xf32> -> vector<2x128xf32>
      %47 = arith.addf %46, %4 : vector<2x128xf32>
      %48 = vector.extract_strided_slice %47 {offsets = [0, 0], sizes = [2, 32], strides = [1, 1]} : vector<2x128xf32> to vector<2x32xf32>
      %cst_20 = arith.constant 5.000000e-01 : f32
      %49 = vector.broadcast %cst_20 : f32 to vector<2x32xf32>
      %50 = arith.mulf %49, %48 : vector<2x32xf32>
      %51 = math.tanh %50 : vector<2x32xf32>
      %cst_21 = arith.constant 5.000000e-01 : f32
      %52 = vector.broadcast %cst_21 : f32 to vector<2x32xf32>
      %53 = arith.mulf %52, %51 : vector<2x32xf32>
      %cst_22 = arith.constant 5.000000e-01 : f32
      %54 = vector.broadcast %cst_22 : f32 to vector<2x32xf32>
      %55 = arith.addf %53, %54 : vector<2x32xf32>
      %56 = vector.extract_strided_slice %47 {offsets = [0, 32], sizes = [2, 32], strides = [1, 1]} : vector<2x128xf32> to vector<2x32xf32>
      %cst_23 = arith.constant 5.000000e-01 : f32
      %57 = vector.broadcast %cst_23 : f32 to vector<2x32xf32>
      %58 = arith.mulf %57, %56 : vector<2x32xf32>
      %59 = math.tanh %58 : vector<2x32xf32>
      %cst_24 = arith.constant 5.000000e-01 : f32
      %60 = vector.broadcast %cst_24 : f32 to vector<2x32xf32>
      %61 = arith.mulf %60, %59 : vector<2x32xf32>
      %cst_25 = arith.constant 5.000000e-01 : f32
      %62 = vector.broadcast %cst_25 : f32 to vector<2x32xf32>
      %63 = arith.addf %61, %62 : vector<2x32xf32>
      %64 = vector.extract_strided_slice %47 {offsets = [0, 64], sizes = [2, 32], strides = [1, 1]} : vector<2x128xf32> to vector<2x32xf32>
      %65 = math.tanh %64 : vector<2x32xf32>
      %66 = vector.extract_strided_slice %47 {offsets = [0, 96], sizes = [2, 32], strides = [1, 1]} : vector<2x128xf32> to vector<2x32xf32>
      %cst_26 = arith.constant 5.000000e-01 : f32
      %67 = vector.broadcast %cst_26 : f32 to vector<2x32xf32>
      %68 = arith.mulf %67, %66 : vector<2x32xf32>
      %69 = math.tanh %68 : vector<2x32xf32>
      %cst_27 = arith.constant 5.000000e-01 : f32
      %70 = vector.broadcast %cst_27 : f32 to vector<2x32xf32>
      %71 = arith.mulf %70, %69 : vector<2x32xf32>
      %cst_28 = arith.constant 5.000000e-01 : f32
      %72 = vector.broadcast %cst_28 : f32 to vector<2x32xf32>
      %73 = arith.addf %71, %72 : vector<2x32xf32>
      %74 = arith.mulf %63, %arg9 : vector<2x32xf32>
      %75 = arith.mulf %55, %65 : vector<2x32xf32>
      %76 = arith.addf %74, %75 : vector<2x32xf32>
      %77 = math.tanh %76 : vector<2x32xf32>
      %78 = arith.mulf %73, %77 : vector<2x32xf32>
      %79 = arith.index_cast %arg5 : i32 to index
      %c0_29 = arith.constant 0 : index
      %c0_30 = arith.constant 0 : index
      %80 = vector.load %arg4[%79, %c0_29, %c0_30] : memref<8x2x32xf32, #tpu.memory_space<vmem>>, vector<1x2x32xf32>
      %81 = vector.shape_cast %80 : vector<1x2x32xf32> to vector<2x32xf32>
      %82 = vector.shape_cast %78 : vector<2x32xf32> to vector<1x2x32xf32>
      tpu.vector_store %arg4[%79, %c0_29, %c0_30], %82 {strides = array<i32>} : memref<8x2x32xf32, #tpu.memory_space<vmem>>, vector<1x2x32xf32>,
      scf.yield %44, %78, %42, %76 : vector<2x32xf32>, vector<2x32xf32>, vector<2x32xf32>, vector<2x32xf32>
    }
    %c8_i32_6 = arith.constant 8 : i32
    return
  }
}

</mosaic_0001>

<llo_original>
// kernel: one_hot_lstm_forward.1
$region0: #{one_hot_lstm_forward.1}
  #allocation0 [shape = 'u32[]', space=smem, size = 0x4, offset = 0x4, fixed_abs, tag = 'smem constant byte address 0x4 - core index']
  #allocation1 [shape = 'u32[144,128]{1,0:T(1,128)}', space=vmem, size = 0x12000, scoped, tag = 'internal scratch']
  %s0 = inlined_call_operand.vmem [shape: f32[8,2,128], index: 0, kind: input, shape index: {}]
  %s1 = inlined_call_operand.hbm [shape: f32[32,128], index: 1, kind: input, shape index: {}]
  %s2 = inlined_call_operand.vmem [shape: f32[64,128], index: 2, kind: input, shape index: {}]
  %s3 = inlined_call_operand.vmem [shape: f32[1,128], index: 3, kind: input, shape index: {}]
  %s4 = inlined_call_operand.vmem [shape: f32[8,2,32], index: 4, kind: output, shape index: {}]
  %s5 = sld [smem:[#allocation0]]
  $region37: #{one_hot_lstm_forward.1} parent=0
    _
  %s7 = ssub.s32 1, %s5
  %s8 = scalar_select 0, %s7, %s5
  $region1: #{one_hot_lstm_forward.1} parent=0
    #allocation2 [shape = 'u8[16384]{0}', space=vmem, size = 0x4000, scoped, tag = 'input window, operand 1, single buffered']
    #allocation3 [shape = 's32[1]{0}', space=sflag, size = 0x4, scoped, tag = 'scoped memory for one_hot_lstm_forward.1']
    %9 = vsyncpa [#allocation3], 0
    // Predicated region
    $region2: #{one_hot_lstm_forward.1} parent=1 // pred_check
      _
    $region3: #{one_hot_lstm_forward.1} parent=1 // pred_check_branch
      %11 = sbr.rel (0) target = $region5
    $region4: #{one_hot_lstm_forward.1} parent=1 // pred_region
      _
    $region5: #{one_hot_lstm_forward.1} parent=1 // pred_fallthru
      _
    // Predicated region
    $region6: #{one_hot_lstm_forward.1} parent=1 // pred_check
      _
    $region7: #{one_hot_lstm_forward.1} parent=1 // pred_check_branch
      %13 = sbr.rel (0) target = $region9
    $region8: #{one_hot_lstm_forward.1} parent=1 // pred_region
      %s15 = ssub.s32 512, 512
      %16 = vsyncadd [#allocation3], %s15
      %s17 = sshll.u32 [#allocation2], 4
      %s18 = int_to_ptr.vmem [resolvable:$true] %s17
      %23 = dma.hbm_to_vmem [thread:$0]  %s1, 512, %s18, [#allocation3], 128, 128, 8
    $region9: #{one_hot_lstm_forward.1} parent=1 // pred_fallthru
      _
    // Predicated region
    $region10: #{one_hot_lstm_forward.1} parent=1 // pred_check
      _
    $region11: #{one_hot_lstm_forward.1} parent=1 // pred_check_branch
      %25 = sbr.rel (0) target = $region13
    $region12: #{one_hot_lstm_forward.1} parent=1 // pred_region
      _
    $region13: #{one_hot_lstm_forward.1} parent=1 // pred_fallthru
      _
    // Predicated region
    $region14: #{one_hot_lstm_forward.1} parent=1 // pred_check
      _
    $region15: #{one_hot_lstm_forward.1} parent=1 // pred_check_branch
      %27 = sbr.rel (0) target = $region17
    $region16: #{one_hot_lstm_forward.1} parent=1 // pred_region
      _
    $region17: #{one_hot_lstm_forward.1} parent=1 // pred_fallthru
      _
    // Predicated region
    $region18: #{one_hot_lstm_forward.1} parent=1 // pred_check
      _
    $region19: #{one_hot_lstm_forward.1} parent=1 // pred_check_branch
      %29 = sbr.rel (0) target = $region21
    $region20: #{one_hot_lstm_forward.1} parent=1 // pred_region
      %30 = dma.done [#allocation3], 512
    $region21: #{one_hot_lstm_forward.1} parent=1 // pred_fallthru
      _
    %v31 = vld [vmem:[#allocation2] sm:$0xff]
    %v32 = vld [vmem:[#allocation2 + $0x8] sm:$0xff]
    %v33 = vld [vmem:[#allocation2 + $0x10] sm:$0xff]
    %v34 = vld [vmem:[#allocation2 + $0x18] sm:$0xff]
    %v35 = vld [vmem:[%s2] sm:$0xff]
    %v36 = vld [vmem:[%s2 + $0x8] sm:$0xff]
    %v37 = vld [vmem:[%s2 + $0x10] sm:$0xff]
    %v38 = vld [vmem:[%s2 + $0x18] sm:$0xff]
    %v39 = vld [vmem:[%s2 + $0x20] sm:$0xff]
    %v40 = vld [vmem:[%s2 + $0x28] sm:$0xff]
    %v41 = vld [vmem:[%s2 + $0x30] sm:$0xff]
    %v42 = vld [vmem:[%s2 + $0x38] sm:$0xff]
    %v43 = vld [vmem:[%s3] sm:$0x1]
    %v45 = vlaneseq
    %v46 = vshrl.u32 %v45, 7
    %v47 = vsub.s32 0, %v46
    %v48 = vrot.slane %v43, %v47
    loop: start=0, step=1, limit=8
    $region22: #{one_hot_lstm_forward.1} parent=1 // loop_pre_header
      _
    $region23: #{one_hot_lstm_forward.1} parent=1 // loop_header
      %s51 = sphi 0, %s55
      %p52 = scmp.ge.s32.totalorder %s51, 8
      %v56 = vphi 0.0, %v161
      %v57 = vphi 0.0, %v266
      %v58 = vphi 0.0, %v155
      %v59 = vphi 0.0, %v260
    $region24: #{one_hot_lstm_forward.1} parent=1 // loop_header_branch
      %54 = sbr.rel (%p52) target = $region28
    $region25: #{one_hot_lstm_forward.1} parent=1 // loop_body
      %s60 = smul.u32 %s51, 2
      %s61 = scalar_lea.vmem %s0, %s60
      %v62 = vld [vmem:[%s61] sm:$0x3]
      %64 = vrot.lane.b32.xlu0 %v56, 32
      %v65 = vpop.permute.xlu0 %64
      %vm66 = vcmask 261120
      %v67 = vsel %vm66, %v65, 0
      %69 = vmatprep.subr.mxu0 0.0
      %70 = vmatpush1.msra.mxu0 0.0
      %71 = vmatprep.subr.mxu0 0.0
      %72 = vmatpush1.msra.mxu0 0.0
      %73 = vmatprep.subr.mxu0 0.0
      %74 = vmatpush1.msra.mxu0 0.0
      %75 = vmatprep.subr.mxu0 0.0
      %76 = vmatpush1.msra.mxu0 0.0
      %77 = vmatprep.subr.mxu0 0.0
      %78 = vmatpush1.msra.mxu0 0.0
      %79 = vmatprep.subr.mxu0 0.0
      %80 = vmatpush1.msra.mxu0 0.0
      %81 = vmatprep.subr.mxu0 0.0
      %82 = vmatpush1.msra.mxu0 0.0
      %83 = vmatprep.subr.mxu0 0.0
      %84 = vmatpush1.msra.mxu0 0.0
      %85 = vmatprep.subr.mxu0 0.0
      %86 = vmatpush1.msra.mxu0 0.0
      %87 = vmatprep.subr.mxu0 0.0
      %88 = vmatpush1.msra.mxu0 0.0
      %89 = vmatprep.subr.mxu0 0.0
      %90 = vmatpush1.msra.mxu0 0.0
      %91 = vmatprep.subr.mxu0 0.0
      %92 = vmatpush1.msra.mxu0 0.0
      %93 = vmatprep.subr.mxu0 0.0
      %94 = vmatpush1.msra.mxu0 %v34
      %95 = vmatprep.subr.mxu0 0.0
      %96 = vmatpush1.msra.mxu0 %v33
      %97 = vmatprep.subr.mxu0 0.0
      %98 = vmatpush1.msra.mxu0 %v32
      %99 = vmatprep.subr.mxu0 0.0
      %100 = vmatpush1.msra.mxu0 %v31
      %101 = vmatprep.subr.mxu0 0.0
      %102 = vmatpush2.msra.mxu0 0.0
      %103 = vmatprep.subr.mxu0 0.0
      %104 = vmatpush2.msra.mxu0 0.0
      %105 = vmatprep.subr.mxu0 0.0
      %106 = vmatpush2.msra.mxu0 0.0
      %107 = vmatprep.subr.mxu0 0.0
      %108 = vmatpush2.msra.mxu0 0.0
      %109 = vmatprep.subr.mxu0 0.0
      %110 = vmatpush2.msra.mxu0 0.0
      %111 = vmatprep.subr.mxu0 0.0
      %112 = vmatpush2.msra.mxu0 0.0
      %113 = vmatprep.subr.mxu0 0.0
      %114 = vmatpush2.msra.mxu0 0.0
      %115 = vmatprep.subr.mxu0 0.0
      %116 = vmatpush2.msra.mxu0 0.0
      %117 = vmatprep.subr.mxu0 0.0
      %118 = vmatpush2.msra.mxu0 0.0
      %119 = vmatprep.subr.mxu0 0.0
      %120 = vmatpush2.msra.mxu0 0.0
      %121 = vmatprep.subr.mxu0 0.0
      %122 = vmatpush2.msra.mxu0 0.0
      %123 = vmatprep.subr.mxu0 0.0
      %124 = vmatpush2.msra.mxu0 0.0
      %125 = vmatprep.subr.mxu0 0.0
      %126 = vmatpush2.msra.mxu0 0.0
      %127 = vmatprep.subr.mxu0 0.0
      %128 = vmatpush2.msra.mxu0 0.0
      %129 = vmatprep.subr.mxu0 0.0
      %130 = vmatpush2.msra.mxu0 0.0
      %131 = vmatprep.subr.mxu0 0.0
      %132 = vmatpush2.msra.mxu0 0.0
      %133 = vmatprep.mubr.f32.mxu0 0.0
      %134 = vmatmul.mubr.f32.gmra.mxu0 %v67
      %v135 = vpop.f32.mrf.mxu0
      %v136 = vadd.f32 0.0, %v135
      %v137 = vpop.f32.mrf.mxu0
      %138 = vdwg.mxu0
      %v139 = vadd.f32 %v62, %v136
      %v140 = vmul.f32 %v139, 0.5
      %v141 = vtanh.pop %v140
      %v142 = vmul.f32 %v141, 0.5
      %v143 = vadd.f32 %v142, 0.5
      %v144 = vtanh.pop %v139
      %v145 = vmul.f32 %v143, %v58
      %147 = vrot.lane.b32.xlu0 %v144, 64
      %v148 = vpop.permute.xlu0 %147
      %v150 = vmul.f32 %v143, %v148
      %152 = vrot.lane.b32.xlu0 %v150, 32
      %v153 = vpop.permute.xlu0 %152
      %v155 = vadd.f32 %v145, %v153
      %v156 = vtanh.pop %v155
      %158 = vrot.lane.b32.xlu0 %v156, 64
      %v159 = vpop.permute.xlu0 %158
      %v161 = vmul.f32 %v143, %v159
      %163 = vrot.lane.b32.xlu0 %v161, 32
      %v164 = vpop.permute.xlu0 %163
      %167 = vrot.lane.b32.xlu0 %v57, 64
      %v168 = vpop.permute.xlu0 %167
      %v170 = vsel %vm66, %v164, %v168
      %vm171 = vcmask 523264
      %v173 = vsel %vm171, %v170, 0
      %175 = vmatprep.subr.mxu0 0.0
      %176 = vmatpush1.msra.mxu0 0.0
      %177 = vmatprep.subr.mxu0 0.0
      %178 = vmatpush1.msra.mxu0 0.0
      %179 = vmatprep.subr.mxu0 0.0
      %180 = vmatpush1.msra.mxu0 0.0
      %181 = vmatprep.subr.mxu0 0.0
      %182 = vmatpush1.msra.mxu0 0.0
      %183 = vmatprep.subr.mxu0 0.0
      %184 = vmatpush1.msra.mxu0 0.0
      %185 = vmatprep.subr.mxu0 0.0
      %186 = vmatpush1.msra.mxu0 0.0
      %187 = vmatprep.subr.mxu0 0.0
      %188 = vmatpush1.msra.mxu0 0.0
      %189 = vmatprep.subr.mxu0 0.0
      %190 = vmatpush1.msra.mxu0 0.0
      %191 = vmatprep.subr.mxu0 0.0
      %192 = vmatpush1.msra.mxu0 %v42
      %193 = vmatprep.subr.mxu0 0.0
      %194 = vmatpush1.msra.mxu0 %v41
      %195 = vmatprep.subr.mxu0 0.0
      %196 = vmatpush1.msra.mxu0 %v40
      %197 = vmatprep.subr.mxu0 0.0
      %198 = vmatpush1.msra.mxu0 %v39
      %199 = vmatprep.subr.mxu0 0.0
      %200 = vmatpush1.msra.mxu0 %v38
      %201 = vmatprep.subr.mxu0 0.0
      %202 = vmatpush1.msra.mxu0 %v37
      %203 = vmatprep.subr.mxu0 0.0
      %204 = vmatpush1.msra.mxu0 %v36
      %205 = vmatprep.subr.mxu0 0.0
      %206 = vmatpush1.msra.mxu0 %v35
      %207 = vmatprep.subr.mxu0 0.0
      %208 = vmatpush2.msra.mxu0 0.0
      %209 = vmatprep.subr.mxu0 0.0
      %210 = vmatpush2.msra.mxu0 0.0
      %211 = vmatprep.subr.mxu0 0.0
      %212 = vmatpush2.msra.mxu0 0.0
      %213 = vmatprep.subr.mxu0 0.0
      %214 = vmatpush2.msra.mxu0 0.0
      %215 = vmatprep.subr.mxu0 0.0
      %216 = vmatpush2.msra.mxu0 0.0
      %217 = vmatprep.subr.mxu0 0.0
      %218 = vmatpush2.msra.mxu0 0.0
      %219 = vmatprep.subr.mxu0 0.0
      %220 = vmatpush2.msra.mxu0 0.0
      %221 = vmatprep.subr.mxu0 0.0
      %222 = vmatpush2.msra.mxu0 0.0
      %223 = vmatprep.subr.mxu0 0.0
      %224 = vmatpush2.msra.mxu0 0.0
      %225 = vmatprep.subr.mxu0 0.0
      %226 = vmatpush2.msra.mxu0 0.0
      %227 = vmatprep.subr.mxu0 0.0
      %228 = vmatpush2.msra.mxu0 0.0
      %229 = vmatprep.subr.mxu0 0.0
      %230 = vmatpush2.msra.mxu0 0.0
      %231 = vmatprep.subr.mxu0 0.0
      %232 = vmatpush2.msra.mxu0 0.0
      %233 = vmatprep.subr.mxu0 0.0
      %234 = vmatpush2.msra.mxu0 0.0
      %235 = vmatprep.subr.mxu0 0.0
      %236 = vmatpush2.msra.mxu0 0.0
      %237 = vmatprep.subr.mxu0 0.0
      %238 = vmatpush2.msra.mxu0 0.0
      %239 = vmatprep.mubr.f32.mxu0 0.0
      %240 = vmatmul.mubr.f32.gmra.mxu0 %v173
      %v241 = vpop.f32.mrf.mxu0
      %v242 = vadd.f32 %v48, %v241
      %v243 = vpop.f32.mrf.mxu0
      %244 = vdwg.mxu0
      %v245 = vmul.f32 %v242, 0.5
      %v246 = vtanh.pop %v245
      %v247 = vmul.f32 %v246, 0.5
      %v248 = vadd.f32 %v247, 0.5
      %v249 = vtanh.pop %v242
      %v250 = vmul.f32 %v248, %v59
      %252 = vrot.lane.b32.xlu0 %v249, 64
      %v253 = vpop.permute.xlu0 %252
      %v255 = vmul.f32 %v248, %v253
      %257 = vrot.lane.b32.xlu0 %v255, 32
      %v258 = vpop.permute.xlu0 %257
      %v260 = vadd.f32 %v250, %v258
      %v261 = vtanh.pop %v260
      %263 = vrot.lane.b32.xlu0 %v261, 64
      %v264 = vpop.permute.xlu0 %263
      %v266 = vmul.f32 %v248, %v264
      %268 = vrot.lane.b32.xlu0 %v266, 32
      %v269 = vpop.permute.xlu0 %268
      %s271 = scalar_lea.vmem %s4, %s60
      %vm272 = vcmask 254976
      %273 = vst.msk [vmem:[%s271] sm:$0x3] %vm272, %v269
    $region26: #{one_hot_lstm_forward.1} parent=1 // loop_footer
      %s55 = sadd.s32 1, %s51
    $region27: #{one_hot_lstm_forward.1} parent=1 // loop_footer_branch
      %50 = sbr.rel target = $region23
    $region28: #{one_hot_lstm_forward.1} parent=1 // loop_exit
      _
    // Predicated region
    $region29: #{one_hot_lstm_forward.1} parent=1 // pred_check
      _
    $region30: #{one_hot_lstm_forward.1} parent=1 // pred_check_branch
      %275 = sbr.rel (0) target = $region32
    $region31: #{one_hot_lstm_forward.1} parent=1 // pred_region
      _
    $region32: #{one_hot_lstm_forward.1} parent=1 // pred_fallthru
      _
    // Predicated region
    $region33: #{one_hot_lstm_forward.1} parent=1 // pred_check
      _
    $region34: #{one_hot_lstm_forward.1} parent=1 // pred_check_branch
      %277 = sbr.rel (0) target = $region36
    $region35: #{one_hot_lstm_forward.1} parent=1 // pred_region
      _
    $region36: #{one_hot_lstm_forward.1} parent=1 // pred_fallthru
      _
    %278 = vsyncpa [#allocation3], 1

</llo_original>
